<compile_context>
chip_gen: v7x
topology: tpu7x:2x2x1
jax: 0.10.0
libtpu: 0.0.40
codegen_flags: <defaults>
</compile_context>

<pallas_src>
import functools

import jax
import jax.numpy as jnp
from jax.experimental import pallas as pl
from jax.experimental.pallas import tpu as pltpu


def _round_up(n, m):
    return ((n + m - 1) // m) * m


def _mlp_kernel(n_layers, *refs):
    # refs = (x_ref, w0, b0, w1, b1, ..., w{L-1}, b{L-1}, out_ref)
    x_ref = refs[0]
    out_ref = refs[-1]
    wb_refs = refs[1:-1]

    h = x_ref[...].astype(jnp.float32)
    for i in range(n_layers):
        w = wb_refs[2 * i][...]
        b = wb_refs[2 * i + 1][...].astype(jnp.float32)
        # Feed the matmul in the weight dtype (f32 or bf16); accumulate in f32.
        h = jnp.dot(h.astype(w.dtype), w, preferred_element_type=jnp.float32)
        h = h + b
        if i < n_layers - 1:  # final Linear has no ReLU
            h = jnp.maximum(h, 0.0)
    out_ref[...] = h.astype(out_ref.dtype)


def dqn_forward(x, weights, biases, *, block_batch=256, param_dtype=None):
    """Fused MLP forward.

    x:          [B, input_dim]
    weights[k]: [in_k, out_k]   (transposed vs. PyTorch nn.Linear.weight)
    biases[k]:  [1, out_k]
    block_batch: rows of x processed per grid step (rounded to sublane=8).
    param_dtype: optional dtype to cast params to (e.g. jnp.bfloat16).
    """
    n_layers = len(weights)
    out_dim = weights[-1].shape[-1]
    in_dim = x.shape[-1]
    batch = x.shape[0]

    if param_dtype is not None:
        weights = [w.astype(param_dtype) for w in weights]
        biases = [b.astype(param_dtype) for b in biases]

    # ---- Lane-dense output: pad the last layer's columns to a 128 multiple.
    out_pad = _round_up(max(out_dim, 128), 128)
    if out_pad != out_dim:
        weights = list(weights)
        biases = list(biases)
        weights[-1] = jnp.pad(weights[-1], ((0, 0), (0, out_pad - out_dim)))
        biases[-1] = jnp.pad(biases[-1], ((0, 0), (0, out_pad - out_dim)))

    # ---- Batch tiling: multiple of 8 sublanes; pad batch rows with zeros.
    tb = min(block_batch, _round_up(batch, 8))
    tb = _round_up(tb, 8)
    b_pad = _round_up(batch, tb)
    if b_pad != batch:
        x = jnp.pad(x, ((0, b_pad - batch), (0, 0)))
    grid = (b_pad // tb,)

    # Interleave params as (w0, b0, w1, b1, ...).
    params = []
    for w, b in zip(weights, biases):
        params.extend([w, b])

    # x / out are tiled over the batch axis; params are grid-invariant (stay
    # resident in VMEM across all grid steps).
    in_specs = [pl.BlockSpec((tb, in_dim), lambda i: (i, 0))]
    for p in params:
        in_specs.append(pl.BlockSpec(p.shape, lambda i: (0, 0)))
    out_specs = pl.BlockSpec((tb, out_pad), lambda i: (i, 0))
    out_shape = jax.ShapeDtypeStruct((b_pad, out_pad), x.dtype)

    kernel = functools.partial(_mlp_kernel, n_layers)

    out = pl.pallas_call(
        kernel,
        out_shape=out_shape,
        grid=grid,
        in_specs=in_specs,
        out_specs=out_specs,
        compiler_params=pltpu.CompilerParams(
            # Batch axis is embarrassingly parallel -> megacore sharding on
            # v7x. (If hidden sizes grow, also set vmem_limit_bytes here.)
            dimension_semantics=("parallel",)
        ),
    )(x, *params)

    return out[:batch, :out_dim]


def init_dqn_params(key, input_dim, hidden_layers, output_dim):
    """Deterministic PyTorch-style (kaiming-uniform) init for each Linear."""
    dims = [input_dim] + list(hidden_layers) + [output_dim]
    weights, biases = [], []
    for k in range(len(dims) - 1):
        fan_in, fan_out = dims[k], dims[k + 1]
        key, kw, kb = jax.random.split(key, 3)
        bound = 1.0 / jnp.sqrt(jnp.float32(fan_in))
        w = jax.random.uniform(
            kw, (fan_in, fan_out), jnp.float32, -bound, bound
        )
        b = jax.random.uniform(kb, (1, fan_out), jnp.float32, -bound, bound)
        weights.append(w)
        biases.append(b)
    return weights, biases


def dqn_reference(x, weights, biases):
    h = x
    n = len(weights)
    for i, (w, b) in enumerate(zip(weights, biases)):
        h = h @ w + b
        if i < n - 1:
            h = jnp.maximum(h, 0.0)
    return h


if __name__ == "__main__":
    # Shapes consistent with the module: input_dim=16, hidden_layers=[32, 32],
    # output_dim=4, dropout=0.1 (identity at eval). Batch large enough to
    # exercise the pipelined batch grid (grid=(4,) at block_batch=256).
    input_dim, hidden_layers, output_dim = 16, [32, 32], 4
    batch = 1024

    key = jax.random.PRNGKey(0)
    key, kx = jax.random.split(key)
    x = jax.random.normal(kx, (batch, input_dim), jnp.float32)

    weights, biases = init_dqn_params(key, input_dim, hidden_layers, output_dim)
    ref = dqn_reference(x, weights, biases)

    # f32 params (matches the PyTorch reference numerics).
    out = dqn_forward(x, weights, biases, block_batch=256)
    out = jax.block_until_ready(out)
    assert out.shape == (batch, output_dim)
    assert jnp.allclose(out, ref, atol=1e-5, rtol=1e-5), "mismatch vs reference"

    # Also exercise a small / non-multiple batch (padding path, grid=(1,)).
    out_small = dqn_forward(x[:7], weights, biases, block_batch=256)
    out_small = jax.block_until_ready(out_small)
    assert out_small.shape == (7, output_dim)
    assert jnp.allclose(out_small, ref[:7], atol=1e-5, rtol=1e-5)

    # bf16 param path (halves param DMA bytes, bf16 MXU with f32 accumulation).
    out_bf16 = dqn_forward(
        x, weights, biases, block_batch=256, param_dtype=jnp.bfloat16
    )
    out_bf16 = jax.block_until_ready(out_bf16)
    assert out_bf16.shape == (batch, output_dim)
    assert jnp.allclose(out_bf16, ref, atol=1e-1, rtol=1e-1)

    print("KERNEL_OK")
</pallas_src>

<mosaic_0001>
module attributes {stable_mosaic.version = 11 : i64} {
  func.func @_mlp_kernel(%arg0: i32, %arg1: memref<256x16xf32, #tpu.memory_space<vmem>>, %arg2: memref<16x32xf32, #tpu.memory_space<vmem>>, %arg3: memref<1x32xf32, #tpu.memory_space<vmem>>, %arg4: memref<32x32xf32, #tpu.memory_space<vmem>>, %arg5: memref<1x32xf32, #tpu.memory_space<vmem>>, %arg6: memref<32x128xf32, #tpu.memory_space<vmem>>, %arg7: memref<1x128xf32, #tpu.memory_space<vmem>>, %arg8: memref<256x128xf32, #tpu.memory_space<vmem>>) attributes {dimension_semantics = [#tpu.dimension_semantics<parallel>], iteration_bounds = array<i64: 4>, scalar_prefetch = 0 : i64, scratch_operands = 0 : i64, tpu.core_type = #tpu.core_type<tc>, window_params = [{transform_indices = @transform_0, window_bounds = array<i64: 256, 16>}, {pipeline_mode = #tpu.pipeline_mode<synchronous>, transform_indices = @transform_1, window_bounds = array<i64: 16, 32>}, {pipeline_mode = #tpu.pipeline_mode<synchronous>, transform_indices = @transform_2, window_bounds = array<i64: 1, 32>}, {pipeline_mode = #tpu.pipeline_mode<synchronous>, transform_indices = @transform_3, window_bounds = array<i64: 32, 32>}, {pipeline_mode = #tpu.pipeline_mode<synchronous>, transform_indices = @transform_4, window_bounds = array<i64: 1, 32>}, {pipeline_mode = #tpu.pipeline_mode<synchronous>, transform_indices = @transform_5, window_bounds = array<i64: 32, 128>}, {pipeline_mode = #tpu.pipeline_mode<synchronous>, transform_indices = @transform_6, window_bounds = array<i64: 1, 128>}, {transform_indices = @transform_7, window_bounds = array<i64: 256, 128>}]} {
    %c0 = arith.constant 0 : index
    %c0_0 = arith.constant 0 : index
    %0 = vector.load %arg1[%c0, %c0_0] : memref<256x16xf32, #tpu.memory_space<vmem>>, vector<256x16xf32>
    %c0_1 = arith.constant 0 : index
    %c0_2 = arith.constant 0 : index
    %1 = vector.load %arg2[%c0_1, %c0_2] : memref<16x32xf32, #tpu.memory_space<vmem>>, vector<16x32xf32>
    %c0_3 = arith.constant 0 : index
    %c0_4 = arith.constant 0 : index
    %2 = vector.load %arg3[%c0_3, %c0_4] : memref<1x32xf32, #tpu.memory_space<vmem>>, vector<1x32xf32>
    %cst = arith.constant dense<0.000000e+00> : vector<256x32xf32>
    %3 = tpu.matmul %0, %1, %cst {dimension_numbers = #tpu.dot_dimension_numbers<[1], [0], [0], [1], [0, 0, 1, 1], [], []>} : vector<256x16xf32>, vector<16x32xf32>, vector<256x32xf32> -> vector<256x32xf32>
    %4 = vector.broadcast %2 : vector<1x32xf32> to vector<256x32xf32>
    %5 = arith.addf %3, %4 : vector<256x32xf32>
    %cst_5 = arith.constant 0.000000e+00 : f32
    %6 = vector.broadcast %cst_5 : f32 to vector<256x32xf32>
    %7 = arith.maximumf %5, %6 : vector<256x32xf32>
    %c0_6 = arith.constant 0 : index
    %c0_7 = arith.constant 0 : index
    %8 = vector.load %arg4[%c0_6, %c0_7] : memref<32x32xf32, #tpu.memory_space<vmem>>, vector<32x32xf32>
    %c0_8 = arith.constant 0 : index
    %c0_9 = arith.constant 0 : index
    %9 = vector.load %arg5[%c0_8, %c0_9] : memref<1x32xf32, #tpu.memory_space<vmem>>, vector<1x32xf32>
    %cst_10 = arith.constant dense<0.000000e+00> : vector<256x32xf32>
    %10 = tpu.matmul %7, %8, %cst_10 {dimension_numbers = #tpu.dot_dimension_numbers<[1], [0], [0], [1], [0, 0, 1, 1], [], []>} : vector<256x32xf32>, vector<32x32xf32>, vector<256x32xf32> -> vector<256x32xf32>
    %11 = vector.broadcast %9 : vector<1x32xf32> to vector<256x32xf32>
    %12 = arith.addf %10, %11 : vector<256x32xf32>
    %cst_11 = arith.constant 0.000000e+00 : f32
    %13 = vector.broadcast %cst_11 : f32 to vector<256x32xf32>
    %14 = arith.maximumf %12, %13 : vector<256x32xf32>
    %c0_12 = arith.constant 0 : index
    %c0_13 = arith.constant 0 : index
    %15 = vector.load %arg6[%c0_12, %c0_13] : memref<32x128xf32, #tpu.memory_space<vmem>>, vector<32x128xf32>
    %c0_14 = arith.constant 0 : index
    %c0_15 = arith.constant 0 : index
    %16 = vector.load %arg7[%c0_14, %c0_15] : memref<1x128xf32, #tpu.memory_space<vmem>>, vector<1x128xf32>
    %cst_16 = arith.constant dense<0.000000e+00> : vector<256x128xf32>
    %17 = tpu.matmul %14, %15, %cst_16 {dimension_numbers = #tpu.dot_dimension_numbers<[1], [0], [0], [1], [0, 0, 1, 1], [], []>} : vector<256x32xf32>, vector<32x128xf32>, vector<256x128xf32> -> vector<256x128xf32>
    %18 = vector.broadcast %16 : vector<1x128xf32> to vector<256x128xf32>
    %19 = arith.addf %17, %18 : vector<256x128xf32>
    %c0_17 = arith.constant 0 : index
    %c0_18 = arith.constant 0 : index
    %20 = vector.load %arg8[%c0_17, %c0_18] : memref<256x128xf32, #tpu.memory_space<vmem>>, vector<256x128xf32>
    tpu.vector_store %arg8[%c0_17, %c0_18], %19 {strides = array<i32>} : memref<256x128xf32, #tpu.memory_space<vmem>>, vector<256x128xf32>,
    return
  }
  func.func @transform_0(%arg0: i32) -> (i32, i32) {
    %c0_i32 = arith.constant 0 : i32
    %c0_i32_0 = arith.constant 0 : i32
    return %arg0, %c0_i32 : i32, i32
  }
  func.func @transform_1(%arg0: i32) -> (i32, i32) {
    %c0_i32 = arith.constant 0 : i32
    %c0_i32_0 = arith.constant 0 : i32
    %c0_i32_1 = arith.constant 0 : i32
    return %c0_i32, %c0_i32_0 : i32, i32
  }
  func.func @transform_2(%arg0: i32) -> (i32, i32) {
    %c0_i32 = arith.constant 0 : i32
    %c0_i32_0 = arith.constant 0 : i32
    %c0_i32_1 = arith.constant 0 : i32
    return %c0_i32, %c0_i32_0 : i32, i32
  }
  func.func @transform_3(%arg0: i32) -> (i32, i32) {
    %c0_i32 = arith.constant 0 : i32
    %c0_i32_0 = arith.constant 0 : i32
    %c0_i32_1 = arith.constant 0 : i32
    return %c0_i32, %c0_i32_0 : i32, i32
  }
  func.func @transform_4(%arg0: i32) -> (i32, i32) {
    %c0_i32 = arith.constant 0 : i32
    %c0_i32_0 = arith.constant 0 : i32
    %c0_i32_1 = arith.constant 0 : i32
    return %c0_i32, %c0_i32_0 : i32, i32
  }
  func.func @transform_5(%arg0: i32) -> (i32, i32) {
    %c0_i32 = arith.constant 0 : i32
    %c0_i32_0 = arith.constant 0 : i32
    %c0_i32_1 = arith.constant 0 : i32
    return %c0_i32, %c0_i32_0 : i32, i32
  }
  func.func @transform_6(%arg0: i32) -> (i32, i32) {
    %c0_i32 = arith.constant 0 : i32
    %c0_i32_0 = arith.constant 0 : i32
    %c0_i32_1 = arith.constant 0 : i32
    return %c0_i32, %c0_i32_0 : i32, i32
  }
  func.func @transform_7(%arg0: i32) -> (i32, i32) {
    %c0_i32 = arith.constant 0 : i32
    %c0_i32_0 = arith.constant 0 : i32
    return %arg0, %c0_i32 : i32, i32
  }
}

</mosaic_0001>

<llo_original>
// kernel: tpu_custom_call.1
$region0: #{tpu_custom_call.1}
  #allocation0 [shape = 'u32[]', space=smem, size = 0x4, offset = 0x4, fixed_abs, tag = 'smem constant byte address 0x4 - core index']
  #allocation1 [shape = 'u32[144,128]{1,0:T(1,128)}', space=vmem, size = 0x12000, scoped, tag = 'internal scratch']
  %s0 = inlined_call_operand.vmem [shape: f32[1024,16], index: 0, kind: input, shape index: {}]
  %s1 = inlined_call_operand.vmem [shape: f32[16,32], index: 1, kind: input, shape index: {}]
  %s2 = inlined_call_operand.vmem [shape: f32[1,32], index: 2, kind: input, shape index: {}]
  %s3 = inlined_call_operand.vmem [shape: f32[32,32], index: 3, kind: input, shape index: {}]
  %s4 = inlined_call_operand.vmem [shape: f32[1,32], index: 4, kind: input, shape index: {}]
  %s5 = inlined_call_operand.vmem [shape: f32[32,128], index: 5, kind: input, shape index: {}]
  %s6 = inlined_call_operand.vmem [shape: f32[1,128], index: 6, kind: input, shape index: {}]
  %s7 = inlined_call_operand.hbm [shape: f32[1024,128], index: 7, kind: output, shape index: {}]
  %s8 = sld [smem:[#allocation0]]
  $region61: #{tpu_custom_call.1} parent=0
    _
  %s10 = ssub.s32 1, %s8
  %s11 = scalar_select 0, %s10, %s8
  $region1: #{tpu_custom_call.1} parent=0
    #allocation2 [shape = 'u8[262144]{0}', space=vmem, size = 0x40000, scoped, tag = 'output window, operand 0']
    #allocation3 [shape = 's32[2]{0}', space=sflag, size = 0x8, scoped, tag = 'scoped memory for tpu_custom_call.1']
    %12 = vsyncpa [#allocation3], 0
    %s13 = scalar_lea.sflag [#allocation3], 1
    %14 = vsyncpa %s13, 0
    loop: start=0, step=1, limit=6
    $region2: #{tpu_custom_call.1} parent=1 // loop_pre_header
      _
    $region3: #{tpu_custom_call.1} parent=1 // loop_header
      %s16 = sphi 0, %s20
      %p17 = scmp.ge.s32.totalorder %s16, 6
      %s26 = sphi 0, %s28
      %s29 = sphi 0, %s26
      %s30 = sphi 0, %s29
      %s46 = sphi 0, %s30
      %s50 = sphi 0, %s50
      %s52 = sphi 0, %s50
      %s53 = sphi 0, %s52
      %s67 = sphi 0, %s53
      %s71 = sphi 0, %s71
      %s73 = sphi 0, %s71
      %s74 = sphi 0, %s73
      %s88 = sphi 0, %s74
      %s92 = sphi 0, %s92
      %s94 = sphi 0, %s92
      %s95 = sphi 0, %s94
      %s109 = sphi 0, %s95
      %s113 = sphi 0, %s113
      %s115 = sphi 0, %s113
      %s116 = sphi 0, %s115
      %s130 = sphi 0, %s116
      %s134 = sphi 0, %s134
      %s136 = sphi 0, %s134
      %s137 = sphi 0, %s136
      %s151 = sphi 0, %s137
      %s155 = sphi 0, %s155
      %s157 = sphi 0, %s155
      %s158 = sphi 0, %s157
      %s172 = sphi 0, %s158
      %s178 = sphi 0, %s180
      %s181 = sphi 0, %s178
      %s182 = sphi 0, %s181
      %s198 = sphi 0, %s182
    $region4: #{tpu_custom_call.1} parent=1 // loop_header_branch
      %19 = sbr.rel (%p17) target = $region8
    $region5: #{tpu_custom_call.1} parent=1 // loop_body
      %s21 = ssub.s32 %s16, 1
      %s22 = ssub.s32 %s16, 2
      %s23 = sadd.s32 %s16, 1
      %s24 = ssub.s32 %s16, %s23
      %p25 = scmp.eq.s32.totalorder %s24, 0
      %s27 = sadd.s32 %s26, 1
      %s28 = scalar_select %p25, %s26, %s27
      %p31 = pneg %p25
      %p32 = scmp.eq.s32.totalorder %s16, 3
      %p33 = por %p31, %p32
      %p34 = scmp.ne.s32.totalorder %s26, %s29
      %p35 = scmp.eq.s32.totalorder %s16, 0
      %p36 = por %p34, %p35
      %p37 = scmp.ne.s32.totalorder %s26, %s29
      %p38 = scmp.eq.s32.totalorder %s21, 3
      %p39 = por %p37, %p38
      %p40 = scmp.ne.s32.totalorder %s29, %s30
      %p41 = scmp.eq.s32.totalorder %s21, 0
      %p42 = por %p40, %p41
      %p43 = scmp.ne.s32.totalorder %s29, %s30
      %p44 = scmp.eq.s32.totalorder %s22, 3
      %p45 = por %p43, %p44
      %p47 = scmp.ne.s32.totalorder %s30, %s46
      %p48 = scmp.eq.s32.totalorder %s22, 0
      %p49 = por %p47, %p48
      %s51 = sadd.s32 %s50, 1
      %p54 = scmp.eq.s32.totalorder %s16, 3
      %p55 = scmp.ne.s32.totalorder %s50, %s52
      %p56 = scmp.eq.s32.totalorder %s16, 0
      %p57 = por %p55, %p56
      %p58 = scmp.ne.s32.totalorder %s50, %s52
      %p59 = scmp.eq.s32.totalorder %s21, 3
      %p60 = por %p58, %p59
      %p61 = scmp.ne.s32.totalorder %s52, %s53
      %p62 = scmp.eq.s32.totalorder %s21, 0
      %p63 = por %p61, %p62
      %p64 = scmp.ne.s32.totalorder %s52, %s53
      %p65 = scmp.eq.s32.totalorder %s22, 3
      %p66 = por %p64, %p65
      %p68 = scmp.ne.s32.totalorder %s53, %s67
      %p69 = scmp.eq.s32.totalorder %s22, 0
      %p70 = por %p68, %p69
      %s72 = sadd.s32 %s71, 1
      %p75 = scmp.eq.s32.totalorder %s16, 3
      %p76 = scmp.ne.s32.totalorder %s71, %s73
      %p77 = scmp.eq.s32.totalorder %s16, 0
      %p78 = por %p76, %p77
      %p79 = scmp.ne.s32.totalorder %s71, %s73
      %p80 = scmp.eq.s32.totalorder %s21, 3
      %p81 = por %p79, %p80
      %p82 = scmp.ne.s32.totalorder %s73, %s74
      %p83 = scmp.eq.s32.totalorder %s21, 0
      %p84 = por %p82, %p83
      %p85 = scmp.ne.s32.totalorder %s73, %s74
      %p86 = scmp.eq.s32.totalorder %s22, 3
      %p87 = por %p85, %p86
      %p89 = scmp.ne.s32.totalorder %s74, %s88
      %p90 = scmp.eq.s32.totalorder %s22, 0
      %p91 = por %p89, %p90
      %s93 = sadd.s32 %s92, 1
      %p96 = scmp.eq.s32.totalorder %s16, 3
      %p97 = scmp.ne.s32.totalorder %s92, %s94
      %p98 = scmp.eq.s32.totalorder %s16, 0
      %p99 = por %p97, %p98
      %p100 = scmp.ne.s32.totalorder %s92, %s94
      %p101 = scmp.eq.s32.totalorder %s21, 3
      %p102 = por %p100, %p101
      %p103 = scmp.ne.s32.totalorder %s94, %s95
      %p104 = scmp.eq.s32.totalorder %s21, 0
      %p105 = por %p103, %p104
      %p106 = scmp.ne.s32.totalorder %s94, %s95
      %p107 = scmp.eq.s32.totalorder %s22, 3
      %p108 = por %p106, %p107
      %p110 = scmp.ne.s32.totalorder %s95, %s109
      %p111 = scmp.eq.s32.totalorder %s22, 0
      %p112 = por %p110, %p111
      %s114 = sadd.s32 %s113, 1
      %p117 = scmp.eq.s32.totalorder %s16, 3
      %p118 = scmp.ne.s32.totalorder %s113, %s115
      %p119 = scmp.eq.s32.totalorder %s16, 0
      %p120 = por %p118, %p119
      %p121 = scmp.ne.s32.totalorder %s113, %s115
      %p122 = scmp.eq.s32.totalorder %s21, 3
      %p123 = por %p121, %p122
      %p124 = scmp.ne.s32.totalorder %s115, %s116
      %p125 = scmp.eq.s32.totalorder %s21, 0
      %p126 = por %p124, %p125
      %p127 = scmp.ne.s32.totalorder %s115, %s116
      %p128 = scmp.eq.s32.totalorder %s22, 3
      %p129 = por %p127, %p128
      %p131 = scmp.ne.s32.totalorder %s116, %s130
      %p132 = scmp.eq.s32.totalorder %s22, 0
      %p133 = por %p131, %p132
      %s135 = sadd.s32 %s134, 1
      %p138 = scmp.eq.s32.totalorder %s16, 3
      %p139 = scmp.ne.s32.totalorder %s134, %s136
      %p140 = scmp.eq.s32.totalorder %s16, 0
      %p141 = por %p139, %p140
      %p142 = scmp.ne.s32.totalorder %s134, %s136
      %p143 = scmp.eq.s32.totalorder %s21, 3
      %p144 = por %p142, %p143
      %p145 = scmp.ne.s32.totalorder %s136, %s137
      %p146 = scmp.eq.s32.totalorder %s21, 0
      %p147 = por %p145, %p146
      %p148 = scmp.ne.s32.totalorder %s136, %s137
      %p149 = scmp.eq.s32.totalorder %s22, 3
      %p150 = por %p148, %p149
      %p152 = scmp.ne.s32.totalorder %s137, %s151
      %p153 = scmp.eq.s32.totalorder %s22, 0
      %p154 = por %p152, %p153
      %s156 = sadd.s32 %s155, 1
      %p159 = scmp.eq.s32.totalorder %s16, 3
      %p160 = scmp.ne.s32.totalorder %s155, %s157
      %p161 = scmp.eq.s32.totalorder %s16, 0
      %p162 = por %p160, %p161
      %p163 = scmp.ne.s32.totalorder %s155, %s157
      %p164 = scmp.eq.s32.totalorder %s21, 3
      %p165 = por %p163, %p164
      %p166 = scmp.ne.s32.totalorder %s157, %s158
      %p167 = scmp.eq.s32.totalorder %s21, 0
      %p168 = por %p166, %p167
      %p169 = scmp.ne.s32.totalorder %s157, %s158
      %p170 = scmp.eq.s32.totalorder %s22, 3
      %p171 = por %p169, %p170
      %p173 = scmp.ne.s32.totalorder %s158, %s172
      %p174 = scmp.eq.s32.totalorder %s22, 0
      %p175 = por %p173, %p174
      %s176 = ssub.s32 %s16, %s23
      %p177 = scmp.eq.s32.totalorder %s176, 0
      %s179 = sadd.s32 %s178, 1
      %s180 = scalar_select %p177, %s178, %s179
      %p183 = pneg %p177
      %p184 = scmp.eq.s32.totalorder %s16, 3
      %p185 = por %p183, %p184
      %p186 = scmp.ne.s32.totalorder %s178, %s181
      %p187 = scmp.eq.s32.totalorder %s16, 0
      %p188 = por %p186, %p187
      %p189 = scmp.ne.s32.totalorder %s178, %s181
      %p190 = scmp.eq.s32.totalorder %s21, 3
      %p191 = por %p189, %p190
      %p192 = scmp.ne.s32.totalorder %s181, %s182
      %p193 = scmp.eq.s32.totalorder %s21, 0
      %p194 = por %p192, %p193
      %p195 = scmp.ne.s32.totalorder %s181, %s182
      %p196 = scmp.eq.s32.totalorder %s22, 3
      %p197 = por %p195, %p196
      %p199 = scmp.ne.s32.totalorder %s182, %s198
      %p200 = scmp.eq.s32.totalorder %s22, 0
      %p201 = por %p199, %p200
      %p202 = scmp.le.s32.totalorder 1, %s16
      %p203 = scmp.lt.s32.totalorder %s16, 5
      %p204 = pnand %p202, %p203
      %p205 = pneg %p204
      // Predicated region
      $region9: #{tpu_custom_call.1} parent=5 // pred_check
        _
      $region10: #{tpu_custom_call.1} parent=5 // pred_check_branch
        %207 = sbr.rel (%p204) target = $region12
      $region11: #{tpu_custom_call.1} parent=5 // pred_region
        %s208 = ssub.s32 %s16, 1
        // Predicated region
        $region13: #{tpu_custom_call.1} parent=11 // pred_check
          %p209 = pneg %p63
        $region14: #{tpu_custom_call.1} parent=11 // pred_check_branch
          %211 = sbr.rel (%p209) target = $region16
        $region15: #{tpu_custom_call.1} parent=11 // pred_region
          _
        $region16: #{tpu_custom_call.1} parent=11 // pred_fallthru
          _
        // Predicated region
        $region17: #{tpu_custom_call.1} parent=11 // pred_check
          %p212 = pneg %p84
        $region18: #{tpu_custom_call.1} parent=11 // pred_check_branch
          %214 = sbr.rel (%p212) target = $region20
        $region19: #{tpu_custom_call.1} parent=11 // pred_region
          _
        $region20: #{tpu_custom_call.1} parent=11 // pred_fallthru
          _
        // Predicated region
        $region21: #{tpu_custom_call.1} parent=11 // pred_check
          %p215 = pneg %p105
        $region22: #{tpu_custom_call.1} parent=11 // pred_check_branch
          %217 = sbr.rel (%p215) target = $region24
        $region23: #{tpu_custom_call.1} parent=11 // pred_region
          _
        $region24: #{tpu_custom_call.1} parent=11 // pred_fallthru
          _
        // Predicated region
        $region25: #{tpu_custom_call.1} parent=11 // pred_check
          %p218 = pneg %p126
        $region26: #{tpu_custom_call.1} parent=11 // pred_check_branch
          %220 = sbr.rel (%p218) target = $region28
        $region27: #{tpu_custom_call.1} parent=11 // pred_region
          _
        $region28: #{tpu_custom_call.1} parent=11 // pred_fallthru
          _
        // Predicated region
        $region29: #{tpu_custom_call.1} parent=11 // pred_check
          %p221 = pneg %p147
        $region30: #{tpu_custom_call.1} parent=11 // pred_check_branch
          %223 = sbr.rel (%p221) target = $region32
        $region31: #{tpu_custom_call.1} parent=11 // pred_region
          _
        $region32: #{tpu_custom_call.1} parent=11 // pred_fallthru
          _
        // Predicated region
        $region33: #{tpu_custom_call.1} parent=11 // pred_check
          %p224 = pneg %p168
        $region34: #{tpu_custom_call.1} parent=11 // pred_check_branch
          %226 = sbr.rel (%p224) target = $region36
        $region35: #{tpu_custom_call.1} parent=11 // pred_region
          _
        $region36: #{tpu_custom_call.1} parent=11 // pred_fallthru
          _
      $region12: #{tpu_custom_call.1} parent=5 // pred_fallthru
        _
      %p227 = scmp.lt.s32.totalorder %s16, 4
      // Predicated region
      $region37: #{tpu_custom_call.1} parent=5 // pred_check
        %p228 = pneg %p227
      $region38: #{tpu_custom_call.1} parent=5 // pred_check_branch
        %230 = sbr.rel (%p228) target = $region40
      $region39: #{tpu_custom_call.1} parent=5 // pred_region
        // Predicated region
        $region41: #{tpu_custom_call.1} parent=39 // pred_check
          %p231 = pneg %p36
        $region42: #{tpu_custom_call.1} parent=39 // pred_check_branch
          %233 = sbr.rel (%p231) target = $region44
        $region43: #{tpu_custom_call.1} parent=39 // pred_region
          %s234 = smul.u32 32, %s16
          %p235 = scmp.lt.s32.totalorder %s234, 127
          %s236 = scalar_select %p235, %s234, 127
          %s237 = smul.addr %s236, 8
          %s238 = scalar_lea.vmem %s0, %s237
          %s239 = smul.u32 32, %s16
        $region44: #{tpu_custom_call.1} parent=39 // pred_fallthru
          _
      $region40: #{tpu_custom_call.1} parent=5 // pred_fallthru
        _
      %p240 = scmp.le.s32.totalorder 1, %s16
      %p241 = scmp.lt.s32.totalorder %s16, 5
      %p242 = pnand %p240, %p241
      %p243 = pneg %p242
      // Predicated region
      $region45: #{tpu_custom_call.1} parent=5 // pred_check
        _
      $region46: #{tpu_custom_call.1} parent=5 // pred_check_branch
        %245 = sbr.rel (%p242) target = $region48
      $region47: #{tpu_custom_call.1} parent=5 // pred_region
        %s246 = ssub.s32 %s16, 1
        %s247 = smul.u32 32, %s21
        %p248 = scmp.lt.s32.totalorder %s247, 127
        %s249 = scalar_select %p248, %s247, 127
        %s250 = smul.addr %s249, 8
        %s251 = scalar_lea.vmem %s0, %s250
        %p252 = pneg %p42
        %p253 = pneg %p39
        %p254 = pneg %p63
        %p255 = pneg %p60
        %p256 = pneg %p84
        %p257 = pneg %p81
        %p258 = pneg %p105
        %p259 = pneg %p102
        %p260 = pneg %p126
        %p261 = pneg %p123
        %p262 = pneg %p147
        %p263 = pneg %p144
        %p264 = pneg %p168
        %p265 = pneg %p165
        %p266 = pneg %p194
        %p267 = pneg %p191
        %s268 = sand.u32 %s181, 1
        %s269 = scalar_lea.sflag [#allocation3], %s268
        %s270 = sand.u32 %s181, 1
        %s271 = smul.addr %s270, 256
        %s272 = scalar_lea.vmem [#allocation2], %s271
        %s273 = smul.u32 32, %s21
        %p274 = scmp.lt.s32.totalorder %s273, 127
        %s275 = scalar_select %p274, %s273, 127
        %s276 = smul.addr %s275, 8
        %s277 = scalar_lea.vmem %s0, %s276
        %s278 = smul.u32 32, %s21
        %s279 = smul.u32 32, %s21
        %v280 = vld [vmem:[%s277] sm:$0xff]
        %v281 = vld [vmem:[%s277 + $0x8] sm:$0xff]
        %v282 = vld [vmem:[%s277 + $0x10] sm:$0xff]
        %v283 = vld [vmem:[%s277 + $0x18] sm:$0xff]
        %v284 = vld [vmem:[%s277 + $0x20] sm:$0xff]
        %v285 = vld [vmem:[%s277 + $0x28] sm:$0xff]
        %v286 = vld [vmem:[%s277 + $0x30] sm:$0xff]
        %v287 = vld [vmem:[%s277 + $0x38] sm:$0xff]
        %v288 = vld [vmem:[%s277 + $0x40] sm:$0xff]
        %v289 = vld [vmem:[%s277 + $0x48] sm:$0xff]
        %v290 = vld [vmem:[%s277 + $0x50] sm:$0xff]
        %v291 = vld [vmem:[%s277 + $0x58] sm:$0xff]
        %v292 = vld [vmem:[%s277 + $0x60] sm:$0xff]
        %v293 = vld [vmem:[%s277 + $0x68] sm:$0xff]
        %v294 = vld [vmem:[%s277 + $0x70] sm:$0xff]
        %v295 = vld [vmem:[%s277 + $0x78] sm:$0xff]
        %v296 = vld [vmem:[%s277 + $0x80] sm:$0xff]
        %v297 = vld [vmem:[%s277 + $0x88] sm:$0xff]
        %v298 = vld [vmem:[%s277 + $0x90] sm:$0xff]
        %v299 = vld [vmem:[%s277 + $0x98] sm:$0xff]
        %v300 = vld [vmem:[%s277 + $0xa0] sm:$0xff]
        %v301 = vld [vmem:[%s277 + $0xa8] sm:$0xff]
        %v302 = vld [vmem:[%s277 + $0xb0] sm:$0xff]
        %v303 = vld [vmem:[%s277 + $0xb8] sm:$0xff]
        %v304 = vld [vmem:[%s277 + $0xc0] sm:$0xff]
        %v305 = vld [vmem:[%s277 + $0xc8] sm:$0xff]
        %v306 = vld [vmem:[%s277 + $0xd0] sm:$0xff]
        %v307 = vld [vmem:[%s277 + $0xd8] sm:$0xff]
        %v308 = vld [vmem:[%s277 + $0xe0] sm:$0xff]
        %v309 = vld [vmem:[%s277 + $0xe8] sm:$0xff]
        %v310 = vld [vmem:[%s277 + $0xf0] sm:$0xff]
        %v311 = vld [vmem:[%s277 + $0xf8] sm:$0xff]
        %v312 = vld [vmem:[%s1] sm:$0xff]
        %v313 = vld [vmem:[%s1 + $0x8] sm:$0xff]
        %v314 = vld [vmem:[%s2] sm:$0x1]
        %v316 = vlaneseq
        %v317 = vshrl.u32 %v316, 7
        %v318 = vsub.s32 0, %v317
        %v319 = vrot.slane %v314, %v318
        %vm321 = vcmask 130048
        %v323 = vsel %vm321, %v280, 0
        %v326 = vsel %vm321, %v281, 0
        %v329 = vsel %vm321, %v282, 0
        %v332 = vsel %vm321, %v283, 0
        %v335 = vsel %vm321, %v284, 0
        %v338 = vsel %vm321, %v285, 0
        %v341 = vsel %vm321, %v286, 0
        %v344 = vsel %vm321, %v287, 0
        %v347 = vsel %vm321, %v288, 0
        %v350 = vsel %vm321, %v289, 0
        %v353 = vsel %vm321, %v290, 0
        %v356 = vsel %vm321, %v291, 0
        %v359 = vsel %vm321, %v292, 0
        %v362 = vsel %vm321, %v293, 0
        %v365 = vsel %vm321, %v294, 0
        %v368 = vsel %vm321, %v295, 0
        %v371 = vsel %vm321, %v296, 0
        %v374 = vsel %vm321, %v297, 0
        %v377 = vsel %vm321, %v298, 0
        %v380 = vsel %vm321, %v299, 0
        %v383 = vsel %vm321, %v300, 0
        %v386 = vsel %vm321, %v301, 0
        %v389 = vsel %vm321, %v302, 0
        %v392 = vsel %vm321, %v303, 0
        %v395 = vsel %vm321, %v304, 0
        %v398 = vsel %vm321, %v305, 0
        %v401 = vsel %vm321, %v306, 0
        %v404 = vsel %vm321, %v307, 0
        %v407 = vsel %vm321, %v308, 0
        %v410 = vsel %vm321, %v309, 0
        %v413 = vsel %vm321, %v310, 0
        %v416 = vsel %vm321, %v311, 0
        %418 = vmatprep.subr.mxu0 0.0
        %419 = vmatpush1.msra.mxu0 %v312
        %420 = vmatprep.subr.mxu0 0.0
        %421 = vmatpush1.msra.mxu0 %v313
        %422 = vmatprep.subr.mxu0 0.0
        %423 = vmatpush1.msra.mxu0 0.0
        %424 = vmatprep.subr.mxu0 0.0
        %425 = vmatpush1.msra.mxu0 0.0
        %426 = vmatprep.subr.mxu0 0.0
        %427 = vmatpush1.msra.mxu0 0.0
        %428 = vmatprep.subr.mxu0 0.0
        %429 = vmatpush1.msra.mxu0 0.0
        %430 = vmatprep.subr.mxu0 0.0
        %431 = vmatpush1.msra.mxu0 0.0
        %432 = vmatprep.subr.mxu0 0.0
        %433 = vmatpush1.msra.mxu0 0.0
        %434 = vmatprep.subr.mxu0 0.0
        %435 = vmatpush1.msra.mxu0 0.0
        %436 = vmatprep.subr.mxu0 0.0
        %437 = vmatpush1.msra.mxu0 0.0
        %438 = vmatprep.subr.mxu0 0.0
        %439 = vmatpush1.msra.mxu0 0.0
        %440 = vmatprep.subr.mxu0 0.0
        %441 = vmatpush1.msra.mxu0 0.0
        %442 = vmatprep.subr.mxu0 0.0
        %443 = vmatpush1.msra.mxu0 0.0
        %444 = vmatprep.subr.mxu0 0.0
        %445 = vmatpush1.msra.mxu0 0.0
        %446 = vmatprep.subr.mxu0 0.0
        %447 = vmatpush1.msra.mxu0 0.0
        %448 = vmatprep.subr.mxu0 0.0
        %449 = vmatpush1.msra.mxu0 0.0
        %450 = vmatprep.subr.mxu0 0.0
        %451 = vmatpush1.msra.mxu0 0.0
        %452 = vmatprep.subr.mxu0 0.0
        %453 = vmatpush1.msra.mxu0 0.0
        %454 = vmatprep.subr.mxu0 0.0
        %455 = vmatpush1.msra.mxu0 0.0
        %456 = vmatprep.subr.mxu0 0.0
        %457 = vmatpush1.msra.mxu0 0.0
        %458 = vmatprep.subr.mxu0 0.0
        %459 = vmatpush1.msra.mxu0 0.0
        %460 = vmatprep.subr.mxu0 0.0
        %461 = vmatpush1.msra.mxu0 0.0
        %462 = vmatprep.subr.mxu0 0.0
        %463 = vmatpush1.msra.mxu0 0.0
        %464 = vmatprep.subr.mxu0 0.0
        %465 = vmatpush1.msra.mxu0 0.0
        %466 = vmatprep.subr.mxu0 0.0
        %467 = vmatpush1.msra.mxu0 0.0
        %468 = vmatprep.subr.mxu0 0.0
        %469 = vmatpush1.msra.mxu0 0.0
        %470 = vmatprep.subr.mxu0 0.0
        %471 = vmatpush1.msra.mxu0 0.0
        %472 = vmatprep.subr.mxu0 0.0
        %473 = vmatpush1.msra.mxu0 0.0
        %474 = vmatprep.subr.mxu0 0.0
        %475 = vmatpush1.msra.mxu0 0.0
        %476 = vmatprep.subr.mxu0 0.0
        %477 = vmatpush1.msra.mxu0 0.0
        %478 = vmatprep.subr.mxu0 0.0
        %479 = vmatpush1.msra.mxu0 0.0
        %480 = vmatprep.subr.mxu0 0.0
        %481 = vmatpush1.msra.mxu0 0.0
        %482 = vmatprep.mubr.f32.mxu0 0.0
        %483 = vmatmul.mubr.f32.gmra.mrb[0].mxu0 %v323
        %v484 = vpop.f32.mrb[0].mxu0
        %v485 = vadd.f32 %v319, %v484
        %v486 = vpop.f32.mrb[0].mxu0
        %487 = vmatprep.mubr.f32.mxu0 0.0
        %488 = vmatmul.mubr.f32.gmra.mrb[0].mxu0 %v326
        %v489 = vpop.f32.mrb[0].mxu0
        %v490 = vadd.f32 %v319, %v489
        %v491 = vpop.f32.mrb[0].mxu0
        %492 = vmatprep.mubr.f32.mxu0 0.0
        %493 = vmatmul.mubr.f32.gmra.mrb[0].mxu0 %v329
        %v494 = vpop.f32.mrb[0].mxu0
        %v495 = vadd.f32 %v319, %v494
        %v496 = vpop.f32.mrb[0].mxu0
        %497 = vmatprep.mubr.f32.mxu0 0.0
        %498 = vmatmul.mubr.f32.gmra.mrb[0].mxu0 %v332
        %v499 = vpop.f32.mrb[0].mxu0
        %v500 = vadd.f32 %v319, %v499
        %v501 = vpop.f32.mrb[0].mxu0
        %502 = vmatprep.mubr.f32.mxu0 0.0
        %503 = vmatmul.mubr.f32.gmra.mrb[0].mxu0 %v335
        %v504 = vpop.f32.mrb[0].mxu0
        %v505 = vadd.f32 %v319, %v504
        %v506 = vpop.f32.mrb[0].mxu0
        %507 = vmatprep.mubr.f32.mxu0 0.0
        %508 = vmatmul.mubr.f32.gmra.mrb[0].mxu0 %v338
        %v509 = vpop.f32.mrb[0].mxu0
        %v510 = vadd.f32 %v319, %v509
        %v511 = vpop.f32.mrb[0].mxu0
        %512 = vmatprep.mubr.f32.mxu0 0.0
        %513 = vmatmul.mubr.f32.gmra.mrb[0].mxu0 %v341
        %v514 = vpop.f32.mrb[0].mxu0
        %v515 = vadd.f32 %v319, %v514
        %v516 = vpop.f32.mrb[0].mxu0
        %517 = vmatprep.mubr.f32.mxu0 0.0
        %518 = vmatmul.mubr.f32.gmra.mrb[0].mxu0 %v344
        %v519 = vpop.f32.mrb[0].mxu0
        %v520 = vadd.f32 %v319, %v519
        %v521 = vpop.f32.mrb[0].mxu0
        %522 = vmatprep.mubr.f32.mxu0 0.0
        %523 = vmatmul.mubr.f32.gmra.mrb[0].mxu0 %v347
        %v524 = vpop.f32.mrb[0].mxu0
        %v525 = vadd.f32 %v319, %v524
        %v526 = vpop.f32.mrb[0].mxu0
        %527 = vmatprep.mubr.f32.mxu0 0.0
        %528 = vmatmul.mubr.f32.gmra.mrb[0].mxu0 %v350
        %v529 = vpop.f32.mrb[0].mxu0
        %v530 = vadd.f32 %v319, %v529
        %v531 = vpop.f32.mrb[0].mxu0
        %532 = vmatprep.mubr.f32.mxu0 0.0
        %533 = vmatmul.mubr.f32.gmra.mrb[0].mxu0 %v353
        %v534 = vpop.f32.mrb[0].mxu0
        %v535 = vadd.f32 %v319, %v534
        %v536 = vpop.f32.mrb[0].mxu0
        %537 = vmatprep.mubr.f32.mxu0 0.0
        %538 = vmatmul.mubr.f32.gmra.mrb[0].mxu0 %v356
        %v539 = vpop.f32.mrb[0].mxu0
        %v540 = vadd.f32 %v319, %v539
        %v541 = vpop.f32.mrb[0].mxu0
        %542 = vmatprep.mubr.f32.mxu0 0.0
        %543 = vmatmul.mubr.f32.gmra.mrb[0].mxu0 %v359
        %v544 = vpop.f32.mrb[0].mxu0
        %v545 = vadd.f32 %v319, %v544
        %v546 = vpop.f32.mrb[0].mxu0
        %547 = vmatprep.mubr.f32.mxu0 0.0
        %548 = vmatmul.mubr.f32.gmra.mrb[0].mxu0 %v362
        %v549 = vpop.f32.mrb[0].mxu0
        %v550 = vadd.f32 %v319, %v549
        %v551 = vpop.f32.mrb[0].mxu0
        %552 = vmatprep.mubr.f32.mxu0 0.0
        %553 = vmatmul.mubr.f32.gmra.mrb[0].mxu0 %v365
        %v554 = vpop.f32.mrb[0].mxu0
        %v555 = vadd.f32 %v319, %v554
        %v556 = vpop.f32.mrb[0].mxu0
        %557 = vmatprep.mubr.f32.mxu0 0.0
        %558 = vmatmul.mubr.f32.gmra.mrb[0].mxu0 %v368
        %v559 = vpop.f32.mrb[0].mxu0
        %v560 = vadd.f32 %v319, %v559
        %v561 = vpop.f32.mrb[0].mxu0
        %562 = vmatprep.mubr.f32.mxu0 0.0
        %563 = vmatmul.mubr.f32.gmra.mrb[0].mxu0 %v371
        %v564 = vpop.f32.mrb[0].mxu0
        %v565 = vadd.f32 %v319, %v564
        %v566 = vpop.f32.mrb[0].mxu0
        %567 = vmatprep.mubr.f32.mxu0 0.0
        %568 = vmatmul.mubr.f32.gmra.mrb[0].mxu0 %v374
        %v569 = vpop.f32.mrb[0].mxu0
        %v570 = vadd.f32 %v319, %v569
        %v571 = vpop.f32.mrb[0].mxu0
        %572 = vmatprep.mubr.f32.mxu0 0.0
        %573 = vmatmul.mubr.f32.gmra.mrb[0].mxu0 %v377
        %v574 = vpop.f32.mrb[0].mxu0
        %v575 = vadd.f32 %v319, %v574
        %v576 = vpop.f32.mrb[0].mxu0
        %577 = vmatprep.mubr.f32.mxu0 0.0
        %578 = vmatmul.mubr.f32.gmra.mrb[0].mxu0 %v380
        %v579 = vpop.f32.mrb[0].mxu0
        %v580 = vadd.f32 %v319, %v579
        %v581 = vpop.f32.mrb[0].mxu0
        %582 = vmatprep.mubr.f32.mxu0 0.0
        %583 = vmatmul.mubr.f32.gmra.mrb[0].mxu0 %v383
        %v584 = vpop.f32.mrb[0].mxu0
        %v585 = vadd.f32 %v319, %v584
        %v586 = vpop.f32.mrb[0].mxu0
        %587 = vmatprep.mubr.f32.mxu0 0.0
        %588 = vmatmul.mubr.f32.gmra.mrb[0].mxu0 %v386
        %v589 = vpop.f32.mrb[0].mxu0
        %v590 = vadd.f32 %v319, %v589
        %v591 = vpop.f32.mrb[0].mxu0
        %592 = vmatprep.mubr.f32.mxu0 0.0
        %593 = vmatmul.mubr.f32.gmra.mrb[0].mxu0 %v389
        %v594 = vpop.f32.mrb[0].mxu0
        %v595 = vadd.f32 %v319, %v594
        %v596 = vpop.f32.mrb[0].mxu0
        %597 = vmatprep.mubr.f32.mxu0 0.0
        %598 = vmatmul.mubr.f32.gmra.mrb[0].mxu0 %v392
        %v599 = vpop.f32.mrb[0].mxu0
        %v600 = vadd.f32 %v319, %v599
        %v601 = vpop.f32.mrb[0].mxu0
        %602 = vmatprep.mubr.f32.mxu0 0.0
        %603 = vmatmul.mubr.f32.gmra.mrb[0].mxu0 %v395
        %v604 = vpop.f32.mrb[0].mxu0
        %v605 = vadd.f32 %v319, %v604
        %v606 = vpop.f32.mrb[0].mxu0
        %607 = vmatprep.mubr.f32.mxu0 0.0
        %608 = vmatmul.mubr.f32.gmra.mrb[0].mxu0 %v398
        %v609 = vpop.f32.mrb[0].mxu0
        %v610 = vadd.f32 %v319, %v609
        %v611 = vpop.f32.mrb[0].mxu0
        %612 = vmatprep.mubr.f32.mxu0 0.0
        %613 = vmatmul.mubr.f32.gmra.mrb[0].mxu0 %v401
        %v614 = vpop.f32.mrb[0].mxu0
        %v615 = vadd.f32 %v319, %v614
        %v616 = vpop.f32.mrb[0].mxu0
        %617 = vmatprep.mubr.f32.mxu0 0.0
        %618 = vmatmul.mubr.f32.gmra.mrb[0].mxu0 %v404
        %v619 = vpop.f32.mrb[0].mxu0
        %v620 = vadd.f32 %v319, %v619
        %v621 = vpop.f32.mrb[0].mxu0
        %622 = vmatprep.mubr.f32.mxu0 0.0
        %623 = vmatmul.mubr.f32.gmra.mrb[0].mxu0 %v407
        %v624 = vpop.f32.mrb[0].mxu0
        %v625 = vadd.f32 %v319, %v624
        %v626 = vpop.f32.mrb[0].mxu0
        %627 = vmatprep.mubr.f32.mxu0 0.0
        %628 = vmatmul.mubr.f32.gmra.mrb[0].mxu0 %v410
        %v629 = vpop.f32.mrb[0].mxu0
        %v630 = vadd.f32 %v319, %v629
        %v631 = vpop.f32.mrb[0].mxu0
        %632 = vmatprep.mubr.f32.mxu0 0.0
        %633 = vmatmul.mubr.f32.gmra.mrb[0].mxu0 %v413
        %v634 = vpop.f32.mrb[0].mxu0
        %v635 = vadd.f32 %v319, %v634
        %v636 = vpop.f32.mrb[0].mxu0
        %637 = vmatprep.mubr.f32.mxu0 0.0
        %638 = vmatmul.mubr.f32.gmra.mrb[0].mxu0 %v416
        %v639 = vpop.f32.mrb[0].mxu0
        %v640 = vadd.f32 %v319, %v639
        %v641 = vpop.f32.mrb[0].mxu0
        %642 = vdwg.mxu0
        %v643 = vmax.f32 %v485, 0.0
        %v644 = vmax.f32 %v490, 0.0
        %v645 = vmax.f32 %v495, 0.0
        %v646 = vmax.f32 %v500, 0.0
        %v647 = vmax.f32 %v505, 0.0
        %v648 = vmax.f32 %v510, 0.0
        %v649 = vmax.f32 %v515, 0.0
        %v650 = vmax.f32 %v520, 0.0
        %v651 = vmax.f32 %v525, 0.0
        %v652 = vmax.f32 %v530, 0.0
        %v653 = vmax.f32 %v535, 0.0
        %v654 = vmax.f32 %v540, 0.0
        %v655 = vmax.f32 %v545, 0.0
        %v656 = vmax.f32 %v550, 0.0
        %v657 = vmax.f32 %v555, 0.0
        %v658 = vmax.f32 %v560, 0.0
        %v659 = vmax.f32 %v565, 0.0
        %v660 = vmax.f32 %v570, 0.0
        %v661 = vmax.f32 %v575, 0.0
        %v662 = vmax.f32 %v580, 0.0
        %v663 = vmax.f32 %v585, 0.0
        %v664 = vmax.f32 %v590, 0.0
        %v665 = vmax.f32 %v595, 0.0
        %v666 = vmax.f32 %v600, 0.0
        %v667 = vmax.f32 %v605, 0.0
        %v668 = vmax.f32 %v610, 0.0
        %v669 = vmax.f32 %v615, 0.0
        %v670 = vmax.f32 %v620, 0.0
        %v671 = vmax.f32 %v625, 0.0
        %v672 = vmax.f32 %v630, 0.0
        %v673 = vmax.f32 %v635, 0.0
        %v674 = vmax.f32 %v640, 0.0
        %v675 = vld [vmem:[%s3] sm:$0xff]
        %v676 = vld [vmem:[%s3 + $0x8] sm:$0xff]
        %v677 = vld [vmem:[%s3 + $0x10] sm:$0xff]
        %v678 = vld [vmem:[%s3 + $0x18] sm:$0xff]
        %v679 = vld [vmem:[%s4] sm:$0x1]
        %v681 = vlaneseq
        %v682 = vshrl.u32 %v681, 7
        %v683 = vsub.s32 0, %v682
        %v684 = vrot.slane %v679, %v683
        %vm686 = vcmask 261120
        %v688 = vsel %vm686, %v643, 0
        %v691 = vsel %vm686, %v644, 0
        %v694 = vsel %vm686, %v645, 0
        %v697 = vsel %vm686, %v646, 0
        %v700 = vsel %vm686, %v647, 0
        %v703 = vsel %vm686, %v648, 0
        %v706 = vsel %vm686, %v649, 0
        %v709 = vsel %vm686, %v650, 0
        %v712 = vsel %vm686, %v651, 0
        %v715 = vsel %vm686, %v652, 0
        %v718 = vsel %vm686, %v653, 0
        %v721 = vsel %vm686, %v654, 0
        %v724 = vsel %vm686, %v655, 0
        %v727 = vsel %vm686, %v656, 0
        %v730 = vsel %vm686, %v657, 0
        %v733 = vsel %vm686, %v658, 0
        %v736 = vsel %vm686, %v659, 0
        %v739 = vsel %vm686, %v660, 0
        %v742 = vsel %vm686, %v661, 0
        %v745 = vsel %vm686, %v662, 0
        %v748 = vsel %vm686, %v663, 0
        %v751 = vsel %vm686, %v664, 0
        %v754 = vsel %vm686, %v665, 0
        %v757 = vsel %vm686, %v666, 0
        %v760 = vsel %vm686, %v667, 0
        %v763 = vsel %vm686, %v668, 0
        %v766 = vsel %vm686, %v669, 0
        %v769 = vsel %vm686, %v670, 0
        %v772 = vsel %vm686, %v671, 0
        %v775 = vsel %vm686, %v672, 0
        %v778 = vsel %vm686, %v673, 0
        %v781 = vsel %vm686, %v674, 0
        %783 = vmatprep.subr.mxu0 0.0
        %784 = vmatpush1.msra.mxu0 %v675
        %785 = vmatprep.subr.mxu0 0.0
        %786 = vmatpush1.msra.mxu0 %v676
        %787 = vmatprep.subr.mxu0 0.0
        %788 = vmatpush1.msra.mxu0 %v677
        %789 = vmatprep.subr.mxu0 0.0
        %790 = vmatpush1.msra.mxu0 %v678
        %791 = vmatprep.subr.mxu0 0.0
        %792 = vmatpush1.msra.mxu0 0.0
        %793 = vmatprep.subr.mxu0 0.0
        %794 = vmatpush1.msra.mxu0 0.0
        %795 = vmatprep.subr.mxu0 0.0
        %796 = vmatpush1.msra.mxu0 0.0
        %797 = vmatprep.subr.mxu0 0.0
        %798 = vmatpush1.msra.mxu0 0.0
        %799 = vmatprep.subr.mxu0 0.0
        %800 = vmatpush1.msra.mxu0 0.0
        %801 = vmatprep.subr.mxu0 0.0
        %802 = vmatpush1.msra.mxu0 0.0
        %803 = vmatprep.subr.mxu0 0.0
        %804 = vmatpush1.msra.mxu0 0.0
        %805 = vmatprep.subr.mxu0 0.0
        %806 = vmatpush1.msra.mxu0 0.0
        %807 = vmatprep.subr.mxu0 0.0
        %808 = vmatpush1.msra.mxu0 0.0
        %809 = vmatprep.subr.mxu0 0.0
        %810 = vmatpush1.msra.mxu0 0.0
        %811 = vmatprep.subr.mxu0 0.0
        %812 = vmatpush1.msra.mxu0 0.0
        %813 = vmatprep.subr.mxu0 0.0
        %814 = vmatpush1.msra.mxu0 0.0
        %815 = vmatprep.subr.mxu0 0.0
        %816 = vmatpush1.msra.mxu0 0.0
        %817 = vmatprep.subr.mxu0 0.0
        %818 = vmatpush1.msra.mxu0 0.0
        %819 = vmatprep.subr.mxu0 0.0
        %820 = vmatpush1.msra.mxu0 0.0
        %821 = vmatprep.subr.mxu0 0.0
        %822 = vmatpush1.msra.mxu0 0.0
        %823 = vmatprep.subr.mxu0 0.0
        %824 = vmatpush1.msra.mxu0 0.0
        %825 = vmatprep.subr.mxu0 0.0
        %826 = vmatpush1.msra.mxu0 0.0
        %827 = vmatprep.subr.mxu0 0.0
        %828 = vmatpush1.msra.mxu0 0.0
        %829 = vmatprep.subr.mxu0 0.0
        %830 = vmatpush1.msra.mxu0 0.0
        %831 = vmatprep.subr.mxu0 0.0
        %832 = vmatpush1.msra.mxu0 0.0
        %833 = vmatprep.subr.mxu0 0.0
        %834 = vmatpush1.msra.mxu0 0.0
        %835 = vmatprep.subr.mxu0 0.0
        %836 = vmatpush1.msra.mxu0 0.0
        %837 = vmatprep.subr.mxu0 0.0
        %838 = vmatpush1.msra.mxu0 0.0
        %839 = vmatprep.subr.mxu0 0.0
        %840 = vmatpush1.msra.mxu0 0.0
        %841 = vmatprep.subr.mxu0 0.0
        %842 = vmatpush1.msra.mxu0 0.0
        %843 = vmatprep.subr.mxu0 0.0
        %844 = vmatpush1.msra.mxu0 0.0
        %845 = vmatprep.subr.mxu0 0.0
        %846 = vmatpush1.msra.mxu0 0.0
        %847 = vmatprep.mubr.f32.mxu0 0.0
        %848 = vmatmul.mubr.f32.gmra.mrb[0].mxu0 %v688
        %v849 = vpop.f32.mrb[0].mxu0
        %v850 = vadd.f32 %v684, %v849
        %v851 = vpop.f32.mrb[0].mxu0
        %852 = vmatprep.mubr.f32.mxu0 0.0
        %853 = vmatmul.mubr.f32.gmra.mrb[0].mxu0 %v691
        %v854 = vpop.f32.mrb[0].mxu0
        %v855 = vadd.f32 %v684, %v854
        %v856 = vpop.f32.mrb[0].mxu0
        %857 = vmatprep.mubr.f32.mxu0 0.0
        %858 = vmatmul.mubr.f32.gmra.mrb[0].mxu0 %v694
        %v859 = vpop.f32.mrb[0].mxu0
        %v860 = vadd.f32 %v684, %v859
        %v861 = vpop.f32.mrb[0].mxu0
        %862 = vmatprep.mubr.f32.mxu0 0.0
        %863 = vmatmul.mubr.f32.gmra.mrb[0].mxu0 %v697
        %v864 = vpop.f32.mrb[0].mxu0
        %v865 = vadd.f32 %v684, %v864
        %v866 = vpop.f32.mrb[0].mxu0
        %867 = vmatprep.mubr.f32.mxu0 0.0
        %868 = vmatmul.mubr.f32.gmra.mrb[0].mxu0 %v700
        %v869 = vpop.f32.mrb[0].mxu0
        %v870 = vadd.f32 %v684, %v869
        %v871 = vpop.f32.mrb[0].mxu0
        %872 = vmatprep.mubr.f32.mxu0 0.0
        %873 = vmatmul.mubr.f32.gmra.mrb[0].mxu0 %v703
        %v874 = vpop.f32.mrb[0].mxu0
        %v875 = vadd.f32 %v684, %v874
        %v876 = vpop.f32.mrb[0].mxu0
        %877 = vmatprep.mubr.f32.mxu0 0.0
        %878 = vmatmul.mubr.f32.gmra.mrb[0].mxu0 %v706
        %v879 = vpop.f32.mrb[0].mxu0
        %v880 = vadd.f32 %v684, %v879
        %v881 = vpop.f32.mrb[0].mxu0
        %882 = vmatprep.mubr.f32.mxu0 0.0
        %883 = vmatmul.mubr.f32.gmra.mrb[0].mxu0 %v709
        %v884 = vpop.f32.mrb[0].mxu0
        %v885 = vadd.f32 %v684, %v884
        %v886 = vpop.f32.mrb[0].mxu0
        %887 = vmatprep.mubr.f32.mxu0 0.0
        %888 = vmatmul.mubr.f32.gmra.mrb[0].mxu0 %v712
        %v889 = vpop.f32.mrb[0].mxu0
        %v890 = vadd.f32 %v684, %v889
        %v891 = vpop.f32.mrb[0].mxu0
        %892 = vmatprep.mubr.f32.mxu0 0.0
        %893 = vmatmul.mubr.f32.gmra.mrb[0].mxu0 %v715
        %v894 = vpop.f32.mrb[0].mxu0
        %v895 = vadd.f32 %v684, %v894
        %v896 = vpop.f32.mrb[0].mxu0
        %897 = vmatprep.mubr.f32.mxu0 0.0
        %898 = vmatmul.mubr.f32.gmra.mrb[0].mxu0 %v718
        %v899 = vpop.f32.mrb[0].mxu0
        %v900 = vadd.f32 %v684, %v899
        %v901 = vpop.f32.mrb[0].mxu0
        %902 = vmatprep.mubr.f32.mxu0 0.0
        %903 = vmatmul.mubr.f32.gmra.mrb[0].mxu0 %v721
        %v904 = vpop.f32.mrb[0].mxu0
        %v905 = vadd.f32 %v684, %v904
        %v906 = vpop.f32.mrb[0].mxu0
        %907 = vmatprep.mubr.f32.mxu0 0.0
        %908 = vmatmul.mubr.f32.gmra.mrb[0].mxu0 %v724
        %v909 = vpop.f32.mrb[0].mxu0
        %v910 = vadd.f32 %v684, %v909
        %v911 = vpop.f32.mrb[0].mxu0
        %912 = vmatprep.mubr.f32.mxu0 0.0
        %913 = vmatmul.mubr.f32.gmra.mrb[0].mxu0 %v727
        %v914 = vpop.f32.mrb[0].mxu0
        %v915 = vadd.f32 %v684, %v914
        %v916 = vpop.f32.mrb[0].mxu0
        %917 = vmatprep.mubr.f32.mxu0 0.0
        %918 = vmatmul.mubr.f32.gmra.mrb[0].mxu0 %v730
        %v919 = vpop.f32.mrb[0].mxu0
        %v920 = vadd.f32 %v684, %v919
        %v921 = vpop.f32.mrb[0].mxu0
        %922 = vmatprep.mubr.f32.mxu0 0.0
        %923 = vmatmul.mubr.f32.gmra.mrb[0].mxu0 %v733
        %v924 = vpop.f32.mrb[0].mxu0
        %v925 = vadd.f32 %v684, %v924
        %v926 = vpop.f32.mrb[0].mxu0
        %927 = vmatprep.mubr.f32.mxu0 0.0
        %928 = vmatmul.mubr.f32.gmra.mrb[0].mxu0 %v736
        %v929 = vpop.f32.mrb[0].mxu0
        %v930 = vadd.f32 %v684, %v929
        %v931 = vpop.f32.mrb[0].mxu0
        %932 = vmatprep.mubr.f32.mxu0 0.0
        %933 = vmatmul.mubr.f32.gmra.mrb[0].mxu0 %v739
        %v934 = vpop.f32.mrb[0].mxu0
        %v935 = vadd.f32 %v684, %v934
        %v936 = vpop.f32.mrb[0].mxu0
        %937 = vmatprep.mubr.f32.mxu0 0.0
        %938 = vmatmul.mubr.f32.gmra.mrb[0].mxu0 %v742
        %v939 = vpop.f32.mrb[0].mxu0
        %v940 = vadd.f32 %v684, %v939
        %v941 = vpop.f32.mrb[0].mxu0
        %942 = vmatprep.mubr.f32.mxu0 0.0
        %943 = vmatmul.mubr.f32.gmra.mrb[0].mxu0 %v745
        %v944 = vpop.f32.mrb[0].mxu0
        %v945 = vadd.f32 %v684, %v944
        %v946 = vpop.f32.mrb[0].mxu0
        %947 = vmatprep.mubr.f32.mxu0 0.0
        %948 = vmatmul.mubr.f32.gmra.mrb[0].mxu0 %v748
        %v949 = vpop.f32.mrb[0].mxu0
        %v950 = vadd.f32 %v684, %v949
        %v951 = vpop.f32.mrb[0].mxu0
        %952 = vmatprep.mubr.f32.mxu0 0.0
        %953 = vmatmul.mubr.f32.gmra.mrb[0].mxu0 %v751
        %v954 = vpop.f32.mrb[0].mxu0
        %v955 = vadd.f32 %v684, %v954
        %v956 = vpop.f32.mrb[0].mxu0
        %957 = vmatprep.mubr.f32.mxu0 0.0
        %958 = vmatmul.mubr.f32.gmra.mrb[0].mxu0 %v754
        %v959 = vpop.f32.mrb[0].mxu0
        %v960 = vadd.f32 %v684, %v959
        %v961 = vpop.f32.mrb[0].mxu0
        %962 = vmatprep.mubr.f32.mxu0 0.0
        %963 = vmatmul.mubr.f32.gmra.mrb[0].mxu0 %v757
        %v964 = vpop.f32.mrb[0].mxu0
        %v965 = vadd.f32 %v684, %v964
        %v966 = vpop.f32.mrb[0].mxu0
        %967 = vmatprep.mubr.f32.mxu0 0.0
        %968 = vmatmul.mubr.f32.gmra.mrb[0].mxu0 %v760
        %v969 = vpop.f32.mrb[0].mxu0
        %v970 = vadd.f32 %v684, %v969
        %v971 = vpop.f32.mrb[0].mxu0
        %972 = vmatprep.mubr.f32.mxu0 0.0
        %973 = vmatmul.mubr.f32.gmra.mrb[0].mxu0 %v763
        %v974 = vpop.f32.mrb[0].mxu0
        %v975 = vadd.f32 %v684, %v974
        %v976 = vpop.f32.mrb[0].mxu0
        %977 = vmatprep.mubr.f32.mxu0 0.0
        %978 = vmatmul.mubr.f32.gmra.mrb[0].mxu0 %v766
        %v979 = vpop.f32.mrb[0].mxu0
        %v980 = vadd.f32 %v684, %v979
        %v981 = vpop.f32.mrb[0].mxu0
        %982 = vmatprep.mubr.f32.mxu0 0.0
        %983 = vmatmul.mubr.f32.gmra.mrb[0].mxu0 %v769
        %v984 = vpop.f32.mrb[0].mxu0
        %v985 = vadd.f32 %v684, %v984
        %v986 = vpop.f32.mrb[0].mxu0
        %987 = vmatprep.mubr.f32.mxu0 0.0
        %988 = vmatmul.mubr.f32.gmra.mrb[0].mxu0 %v772
        %v989 = vpop.f32.mrb[0].mxu0
        %v990 = vadd.f32 %v684, %v989
        %v991 = vpop.f32.mrb[0].mxu0
        %992 = vmatprep.mubr.f32.mxu0 0.0
        %993 = vmatmul.mubr.f32.gmra.mrb[0].mxu0 %v775
        %v994 = vpop.f32.mrb[0].mxu0
        %v995 = vadd.f32 %v684, %v994
        %v996 = vpop.f32.mrb[0].mxu0
        %997 = vmatprep.mubr.f32.mxu0 0.0
        %998 = vmatmul.mubr.f32.gmra.mrb[0].mxu0 %v778
        %v999 = vpop.f32.mrb[0].mxu0
        %v1000 = vadd.f32 %v684, %v999
        %v1001 = vpop.f32.mrb[0].mxu0
        %1002 = vmatprep.mubr.f32.mxu0 0.0
        %1003 = vmatmul.mubr.f32.gmra.mrb[0].mxu0 %v781
        %v1004 = vpop.f32.mrb[0].mxu0
        %v1005 = vadd.f32 %v684, %v1004
        %v1006 = vpop.f32.mrb[0].mxu0
        %1007 = vdwg.mxu0
        %v1008 = vmax.f32 %v850, 0.0
        %v1009 = vmax.f32 %v855, 0.0
        %v1010 = vmax.f32 %v860, 0.0
        %v1011 = vmax.f32 %v865, 0.0
        %v1012 = vmax.f32 %v870, 0.0
        %v1013 = vmax.f32 %v875, 0.0
        %v1014 = vmax.f32 %v880, 0.0
        %v1015 = vmax.f32 %v885, 0.0
        %v1016 = vmax.f32 %v890, 0.0
        %v1017 = vmax.f32 %v895, 0.0
        %v1018 = vmax.f32 %v900, 0.0
        %v1019 = vmax.f32 %v905, 0.0
        %v1020 = vmax.f32 %v910, 0.0
        %v1021 = vmax.f32 %v915, 0.0
        %v1022 = vmax.f32 %v920, 0.0
        %v1023 = vmax.f32 %v925, 0.0
        %v1024 = vmax.f32 %v930, 0.0
        %v1025 = vmax.f32 %v935, 0.0
        %v1026 = vmax.f32 %v940, 0.0
        %v1027 = vmax.f32 %v945, 0.0
        %v1028 = vmax.f32 %v950, 0.0
        %v1029 = vmax.f32 %v955, 0.0
        %v1030 = vmax.f32 %v960, 0.0
        %v1031 = vmax.f32 %v965, 0.0
        %v1032 = vmax.f32 %v970, 0.0
        %v1033 = vmax.f32 %v975, 0.0
        %v1034 = vmax.f32 %v980, 0.0
        %v1035 = vmax.f32 %v985, 0.0
        %v1036 = vmax.f32 %v990, 0.0
        %v1037 = vmax.f32 %v995, 0.0
        %v1038 = vmax.f32 %v1000, 0.0
        %v1039 = vmax.f32 %v1005, 0.0
        %v1040 = vld [vmem:[%s5] sm:$0xff]
        %v1041 = vld [vmem:[%s5 + $0x8] sm:$0xff]
        %v1042 = vld [vmem:[%s5 + $0x10] sm:$0xff]
        %v1043 = vld [vmem:[%s5 + $0x18] sm:$0xff]
        %v1044 = vld [vmem:[%s6] sm:$0x1]
        %v1046 = vlaneseq
        %v1047 = vshrl.u32 %v1046, 7
        %v1048 = vsub.s32 0, %v1047
        %v1049 = vrot.slane %v1044, %v1048
        %v1052 = vsel %vm686, %v1008, 0
        %v1055 = vsel %vm686, %v1009, 0
        %v1058 = vsel %vm686, %v1010, 0
        %v1061 = vsel %vm686, %v1011, 0
        %v1064 = vsel %vm686, %v1012, 0
        %v1067 = vsel %vm686, %v1013, 0
        %v1070 = vsel %vm686, %v1014, 0
        %v1073 = vsel %vm686, %v1015, 0
        %v1076 = vsel %vm686, %v1016, 0
        %v1079 = vsel %vm686, %v1017, 0
        %v1082 = vsel %vm686, %v1018, 0
        %v1085 = vsel %vm686, %v1019, 0
        %v1088 = vsel %vm686, %v1020, 0
        %v1091 = vsel %vm686, %v1021, 0
        %v1094 = vsel %vm686, %v1022, 0
        %v1097 = vsel %vm686, %v1023, 0
        %v1100 = vsel %vm686, %v1024, 0
        %v1103 = vsel %vm686, %v1025, 0
        %v1106 = vsel %vm686, %v1026, 0
        %v1109 = vsel %vm686, %v1027, 0
        %v1112 = vsel %vm686, %v1028, 0
        %v1115 = vsel %vm686, %v1029, 0
        %v1118 = vsel %vm686, %v1030, 0
        %v1121 = vsel %vm686, %v1031, 0
        %v1124 = vsel %vm686, %v1032, 0
        %v1127 = vsel %vm686, %v1033, 0
        %v1130 = vsel %vm686, %v1034, 0
        %v1133 = vsel %vm686, %v1035, 0
        %v1136 = vsel %vm686, %v1036, 0
        %v1139 = vsel %vm686, %v1037, 0
        %v1142 = vsel %vm686, %v1038, 0
        %v1145 = vsel %vm686, %v1039, 0
        %1147 = vmatprep.subr.mxu0 0.0
        %1148 = vmatpush1.msra.mxu0 %v1040
        %1149 = vmatprep.subr.mxu0 0.0
        %1150 = vmatpush1.msra.mxu0 %v1041
        %1151 = vmatprep.subr.mxu0 0.0
        %1152 = vmatpush1.msra.mxu0 %v1042
        %1153 = vmatprep.subr.mxu0 0.0
        %1154 = vmatpush1.msra.mxu0 %v1043
        %1155 = vmatprep.subr.mxu0 0.0
        %1156 = vmatpush1.msra.mxu0 0.0
        %1157 = vmatprep.subr.mxu0 0.0
        %1158 = vmatpush1.msra.mxu0 0.0
        %1159 = vmatprep.subr.mxu0 0.0
        %1160 = vmatpush1.msra.mxu0 0.0
        %1161 = vmatprep.subr.mxu0 0.0
        %1162 = vmatpush1.msra.mxu0 0.0
        %1163 = vmatprep.subr.mxu0 0.0
        %1164 = vmatpush1.msra.mxu0 0.0
        %1165 = vmatprep.subr.mxu0 0.0
        %1166 = vmatpush1.msra.mxu0 0.0
        %1167 = vmatprep.subr.mxu0 0.0
        %1168 = vmatpush1.msra.mxu0 0.0
        %1169 = vmatprep.subr.mxu0 0.0
        %1170 = vmatpush1.msra.mxu0 0.0
        %1171 = vmatprep.subr.mxu0 0.0
        %1172 = vmatpush1.msra.mxu0 0.0
        %1173 = vmatprep.subr.mxu0 0.0
        %1174 = vmatpush1.msra.mxu0 0.0
        %1175 = vmatprep.subr.mxu0 0.0
        %1176 = vmatpush1.msra.mxu0 0.0
        %1177 = vmatprep.subr.mxu0 0.0
        %1178 = vmatpush1.msra.mxu0 0.0
        %1179 = vmatprep.subr.mxu0 0.0
        %1180 = vmatpush1.msra.mxu0 0.0
        %1181 = vmatprep.subr.mxu0 0.0
        %1182 = vmatpush1.msra.mxu0 0.0
        %1183 = vmatprep.subr.mxu0 0.0
        %1184 = vmatpush1.msra.mxu0 0.0
        %1185 = vmatprep.subr.mxu0 0.0
        %1186 = vmatpush1.msra.mxu0 0.0
        %1187 = vmatprep.subr.mxu0 0.0
        %1188 = vmatpush1.msra.mxu0 0.0
        %1189 = vmatprep.subr.mxu0 0.0
        %1190 = vmatpush1.msra.mxu0 0.0
        %1191 = vmatprep.subr.mxu0 0.0
        %1192 = vmatpush1.msra.mxu0 0.0
        %1193 = vmatprep.subr.mxu0 0.0
        %1194 = vmatpush1.msra.mxu0 0.0
        %1195 = vmatprep.subr.mxu0 0.0
        %1196 = vmatpush1.msra.mxu0 0.0
        %1197 = vmatprep.subr.mxu0 0.0
        %1198 = vmatpush1.msra.mxu0 0.0
        %1199 = vmatprep.subr.mxu0 0.0
        %1200 = vmatpush1.msra.mxu0 0.0
        %1201 = vmatprep.subr.mxu0 0.0
        %1202 = vmatpush1.msra.mxu0 0.0
        %1203 = vmatprep.subr.mxu0 0.0
        %1204 = vmatpush1.msra.mxu0 0.0
        %1205 = vmatprep.subr.mxu0 0.0
        %1206 = vmatpush1.msra.mxu0 0.0
        %1207 = vmatprep.subr.mxu0 0.0
        %1208 = vmatpush1.msra.mxu0 0.0
        %1209 = vmatprep.subr.mxu0 0.0
        %1210 = vmatpush1.msra.mxu0 0.0
        %1211 = vmatprep.mubr.f32.mxu0 0.0
        %1212 = vmatmul.mubr.f32.gmra.mrb[0].mxu0 %v1052
        %v1213 = vpop.f32.mrb[0].mxu0
        %v1214 = vadd.f32 %v1049, %v1213
        %v1215 = vpop.f32.mrb[0].mxu0
        %1216 = vmatprep.mubr.f32.mxu0 0.0
        %1217 = vmatmul.mubr.f32.gmra.mrb[0].mxu0 %v1055
        %v1218 = vpop.f32.mrb[0].mxu0
        %v1219 = vadd.f32 %v1049, %v1218
        %v1220 = vpop.f32.mrb[0].mxu0
        %1221 = vmatprep.mubr.f32.mxu0 0.0
        %1222 = vmatmul.mubr.f32.gmra.mrb[0].mxu0 %v1058
        %v1223 = vpop.f32.mrb[0].mxu0
        %v1224 = vadd.f32 %v1049, %v1223
        %v1225 = vpop.f32.mrb[0].mxu0
        %1226 = vmatprep.mubr.f32.mxu0 0.0
        %1227 = vmatmul.mubr.f32.gmra.mrb[0].mxu0 %v1061
        %v1228 = vpop.f32.mrb[0].mxu0
        %v1229 = vadd.f32 %v1049, %v1228
        %v1230 = vpop.f32.mrb[0].mxu0
        %1231 = vmatprep.mubr.f32.mxu0 0.0
        %1232 = vmatmul.mubr.f32.gmra.mrb[0].mxu0 %v1064
        %v1233 = vpop.f32.mrb[0].mxu0
        %v1234 = vadd.f32 %v1049, %v1233
        %v1235 = vpop.f32.mrb[0].mxu0
        %1236 = vmatprep.mubr.f32.mxu0 0.0
        %1237 = vmatmul.mubr.f32.gmra.mrb[0].mxu0 %v1067
        %v1238 = vpop.f32.mrb[0].mxu0
        %v1239 = vadd.f32 %v1049, %v1238
        %v1240 = vpop.f32.mrb[0].mxu0
        %1241 = vmatprep.mubr.f32.mxu0 0.0
        %1242 = vmatmul.mubr.f32.gmra.mrb[0].mxu0 %v1070
        %v1243 = vpop.f32.mrb[0].mxu0
        %v1244 = vadd.f32 %v1049, %v1243
        %v1245 = vpop.f32.mrb[0].mxu0
        %1246 = vmatprep.mubr.f32.mxu0 0.0
        %1247 = vmatmul.mubr.f32.gmra.mrb[0].mxu0 %v1073
        %v1248 = vpop.f32.mrb[0].mxu0
        %v1249 = vadd.f32 %v1049, %v1248
        %v1250 = vpop.f32.mrb[0].mxu0
        %1251 = vmatprep.mubr.f32.mxu0 0.0
        %1252 = vmatmul.mubr.f32.gmra.mrb[0].mxu0 %v1076
        %v1253 = vpop.f32.mrb[0].mxu0
        %v1254 = vadd.f32 %v1049, %v1253
        %v1255 = vpop.f32.mrb[0].mxu0
        %1256 = vmatprep.mubr.f32.mxu0 0.0
        %1257 = vmatmul.mubr.f32.gmra.mrb[0].mxu0 %v1079
        %v1258 = vpop.f32.mrb[0].mxu0
        %v1259 = vadd.f32 %v1049, %v1258
        %v1260 = vpop.f32.mrb[0].mxu0
        %1261 = vmatprep.mubr.f32.mxu0 0.0
        %1262 = vmatmul.mubr.f32.gmra.mrb[0].mxu0 %v1082
        %v1263 = vpop.f32.mrb[0].mxu0
        %v1264 = vadd.f32 %v1049, %v1263
        %v1265 = vpop.f32.mrb[0].mxu0
        %1266 = vmatprep.mubr.f32.mxu0 0.0
        %1267 = vmatmul.mubr.f32.gmra.mrb[0].mxu0 %v1085
        %v1268 = vpop.f32.mrb[0].mxu0
        %v1269 = vadd.f32 %v1049, %v1268
        %v1270 = vpop.f32.mrb[0].mxu0
        %1271 = vmatprep.mubr.f32.mxu0 0.0
        %1272 = vmatmul.mubr.f32.gmra.mrb[0].mxu0 %v1088
        %v1273 = vpop.f32.mrb[0].mxu0
        %v1274 = vadd.f32 %v1049, %v1273
        %v1275 = vpop.f32.mrb[0].mxu0
        %1276 = vmatprep.mubr.f32.mxu0 0.0
        %1277 = vmatmul.mubr.f32.gmra.mrb[0].mxu0 %v1091
        %v1278 = vpop.f32.mrb[0].mxu0
        %v1279 = vadd.f32 %v1049, %v1278
        %v1280 = vpop.f32.mrb[0].mxu0
        %1281 = vmatprep.mubr.f32.mxu0 0.0
        %1282 = vmatmul.mubr.f32.gmra.mrb[0].mxu0 %v1094
        %v1283 = vpop.f32.mrb[0].mxu0
        %v1284 = vadd.f32 %v1049, %v1283
        %v1285 = vpop.f32.mrb[0].mxu0
        %1286 = vmatprep.mubr.f32.mxu0 0.0
        %1287 = vmatmul.mubr.f32.gmra.mrb[0].mxu0 %v1097
        %v1288 = vpop.f32.mrb[0].mxu0
        %v1289 = vadd.f32 %v1049, %v1288
        %v1290 = vpop.f32.mrb[0].mxu0
        %1291 = vmatprep.mubr.f32.mxu0 0.0
        %1292 = vmatmul.mubr.f32.gmra.mrb[0].mxu0 %v1100
        %v1293 = vpop.f32.mrb[0].mxu0
        %v1294 = vadd.f32 %v1049, %v1293
        %v1295 = vpop.f32.mrb[0].mxu0
        %1296 = vmatprep.mubr.f32.mxu0 0.0
        %1297 = vmatmul.mubr.f32.gmra.mrb[0].mxu0 %v1103
        %v1298 = vpop.f32.mrb[0].mxu0
        %v1299 = vadd.f32 %v1049, %v1298
        %v1300 = vpop.f32.mrb[0].mxu0
        %1301 = vmatprep.mubr.f32.mxu0 0.0
        %1302 = vmatmul.mubr.f32.gmra.mrb[0].mxu0 %v1106
        %v1303 = vpop.f32.mrb[0].mxu0
        %v1304 = vadd.f32 %v1049, %v1303
        %v1305 = vpop.f32.mrb[0].mxu0
        %1306 = vmatprep.mubr.f32.mxu0 0.0
        %1307 = vmatmul.mubr.f32.gmra.mrb[0].mxu0 %v1109
        %v1308 = vpop.f32.mrb[0].mxu0
        %v1309 = vadd.f32 %v1049, %v1308
        %v1310 = vpop.f32.mrb[0].mxu0
        %1311 = vmatprep.mubr.f32.mxu0 0.0
        %1312 = vmatmul.mubr.f32.gmra.mrb[0].mxu0 %v1112
        %v1313 = vpop.f32.mrb[0].mxu0
        %v1314 = vadd.f32 %v1049, %v1313
        %v1315 = vpop.f32.mrb[0].mxu0
        %1316 = vmatprep.mubr.f32.mxu0 0.0
        %1317 = vmatmul.mubr.f32.gmra.mrb[0].mxu0 %v1115
        %v1318 = vpop.f32.mrb[0].mxu0
        %v1319 = vadd.f32 %v1049, %v1318
        %v1320 = vpop.f32.mrb[0].mxu0
        %1321 = vmatprep.mubr.f32.mxu0 0.0
        %1322 = vmatmul.mubr.f32.gmra.mrb[0].mxu0 %v1118
        %v1323 = vpop.f32.mrb[0].mxu0
        %v1324 = vadd.f32 %v1049, %v1323
        %v1325 = vpop.f32.mrb[0].mxu0
        %1326 = vmatprep.mubr.f32.mxu0 0.0
        %1327 = vmatmul.mubr.f32.gmra.mrb[0].mxu0 %v1121
        %v1328 = vpop.f32.mrb[0].mxu0
        %v1329 = vadd.f32 %v1049, %v1328
        %v1330 = vpop.f32.mrb[0].mxu0
        %1331 = vmatprep.mubr.f32.mxu0 0.0
        %1332 = vmatmul.mubr.f32.gmra.mrb[0].mxu0 %v1124
        %v1333 = vpop.f32.mrb[0].mxu0
        %v1334 = vadd.f32 %v1049, %v1333
        %v1335 = vpop.f32.mrb[0].mxu0
        %1336 = vmatprep.mubr.f32.mxu0 0.0
        %1337 = vmatmul.mubr.f32.gmra.mrb[0].mxu0 %v1127
        %v1338 = vpop.f32.mrb[0].mxu0
        %v1339 = vadd.f32 %v1049, %v1338
        %v1340 = vpop.f32.mrb[0].mxu0
        %1341 = vmatprep.mubr.f32.mxu0 0.0
        %1342 = vmatmul.mubr.f32.gmra.mrb[0].mxu0 %v1130
        %v1343 = vpop.f32.mrb[0].mxu0
        %v1344 = vadd.f32 %v1049, %v1343
        %v1345 = vpop.f32.mrb[0].mxu0
        %1346 = vmatprep.mubr.f32.mxu0 0.0
        %1347 = vmatmul.mubr.f32.gmra.mrb[0].mxu0 %v1133
        %v1348 = vpop.f32.mrb[0].mxu0
        %v1349 = vadd.f32 %v1049, %v1348
        %v1350 = vpop.f32.mrb[0].mxu0
        %1351 = vmatprep.mubr.f32.mxu0 0.0
        %1352 = vmatmul.mubr.f32.gmra.mrb[0].mxu0 %v1136
        %v1353 = vpop.f32.mrb[0].mxu0
        %v1354 = vadd.f32 %v1049, %v1353
        %v1355 = vpop.f32.mrb[0].mxu0
        %1356 = vmatprep.mubr.f32.mxu0 0.0
        %1357 = vmatmul.mubr.f32.gmra.mrb[0].mxu0 %v1139
        %v1358 = vpop.f32.mrb[0].mxu0
        %v1359 = vadd.f32 %v1049, %v1358
        %v1360 = vpop.f32.mrb[0].mxu0
        %1361 = vmatprep.mubr.f32.mxu0 0.0
        %1362 = vmatmul.mubr.f32.gmra.mrb[0].mxu0 %v1142
        %v1363 = vpop.f32.mrb[0].mxu0
        %v1364 = vadd.f32 %v1049, %v1363
        %v1365 = vpop.f32.mrb[0].mxu0
        %1366 = vmatprep.mubr.f32.mxu0 0.0
        %1367 = vmatmul.mubr.f32.gmra.mrb[0].mxu0 %v1145
        %v1368 = vpop.f32.mrb[0].mxu0
        %v1369 = vadd.f32 %v1049, %v1368
        %v1370 = vpop.f32.mrb[0].mxu0
        %1371 = vdwg.mxu0
        %1372 = vst [vmem:[%s272] sm:$0xff] %v1214
        %1373 = vst [vmem:[%s272 + $0x8] sm:$0xff] %v1219
        %1374 = vst [vmem:[%s272 + $0x10] sm:$0xff] %v1224
        %1375 = vst [vmem:[%s272 + $0x18] sm:$0xff] %v1229
        %1376 = vst [vmem:[%s272 + $0x20] sm:$0xff] %v1234
        %1377 = vst [vmem:[%s272 + $0x28] sm:$0xff] %v1239
        %1378 = vst [vmem:[%s272 + $0x30] sm:$0xff] %v1244
        %1379 = vst [vmem:[%s272 + $0x38] sm:$0xff] %v1249
        %1380 = vst [vmem:[%s272 + $0x40] sm:$0xff] %v1254
        %1381 = vst [vmem:[%s272 + $0x48] sm:$0xff] %v1259
        %1382 = vst [vmem:[%s272 + $0x50] sm:$0xff] %v1264
        %1383 = vst [vmem:[%s272 + $0x58] sm:$0xff] %v1269
        %1384 = vst [vmem:[%s272 + $0x60] sm:$0xff] %v1274
        %1385 = vst [vmem:[%s272 + $0x68] sm:$0xff] %v1279
        %1386 = vst [vmem:[%s272 + $0x70] sm:$0xff] %v1284
        %1387 = vst [vmem:[%s272 + $0x78] sm:$0xff] %v1289
        %1388 = vst [vmem:[%s272 + $0x80] sm:$0xff] %v1294
        %1389 = vst [vmem:[%s272 + $0x88] sm:$0xff] %v1299
        %1390 = vst [vmem:[%s272 + $0x90] sm:$0xff] %v1304
        %1391 = vst [vmem:[%s272 + $0x98] sm:$0xff] %v1309
        %1392 = vst [vmem:[%s272 + $0xa0] sm:$0xff] %v1314
        %1393 = vst [vmem:[%s272 + $0xa8] sm:$0xff] %v1319
        %1394 = vst [vmem:[%s272 + $0xb0] sm:$0xff] %v1324
        %1395 = vst [vmem:[%s272 + $0xb8] sm:$0xff] %v1329
        %1396 = vst [vmem:[%s272 + $0xc0] sm:$0xff] %v1334
        %1397 = vst [vmem:[%s272 + $0xc8] sm:$0xff] %v1339
        %1398 = vst [vmem:[%s272 + $0xd0] sm:$0xff] %v1344
        %1399 = vst [vmem:[%s272 + $0xd8] sm:$0xff] %v1349
        %1400 = vst [vmem:[%s272 + $0xe0] sm:$0xff] %v1354
        %1401 = vst [vmem:[%s272 + $0xe8] sm:$0xff] %v1359
        %1402 = vst [vmem:[%s272 + $0xf0] sm:$0xff] %v1364
        %1403 = vst [vmem:[%s272 + $0xf8] sm:$0xff] %v1369
        %s1404 = sand.u32 %s181, 1
        %s1405 = scalar_lea.sflag [#allocation3], %s1404
        %s1406 = sand.u32 %s181, 1
        %s1407 = smul.addr %s1406, 256
        %s1408 = scalar_lea.vmem [#allocation2], %s1407
        // Predicated region
        $region49: #{tpu_custom_call.1} parent=47 // pred_check
          %p1409 = pneg %p191
        $region50: #{tpu_custom_call.1} parent=47 // pred_check_branch
          %1411 = sbr.rel (%p1409) target = $region52
        $region51: #{tpu_custom_call.1} parent=47 // pred_region
          %s1412 = smul.u32 32, %s21
          %s1414 = ssub.s32 4096, 4096
          %1415 = vsyncadd %s1405, %s1414
          %s1416 = smul.addr %s1412, 128
          %s1417 = scalar_lea.hbm %s7, %s1416
          %s1418 = sshll.u32 %s1408, 4
          %s1419 = int_to_ptr.vmem [resolvable:$true] %s1418
          %1424 = dma.vmem_to_hbm [thread:$0]  %s1419, 4096, %s1417, %s1405, 128, 128, 8
        $region52: #{tpu_custom_call.1} parent=47 // pred_fallthru
          _
      $region48: #{tpu_custom_call.1} parent=5 // pred_fallthru
        _
      %p1425 = scmp.le.s32.totalorder 2, %s16
      // Predicated region
      $region53: #{tpu_custom_call.1} parent=5 // pred_check
        %p1426 = pneg %p1425
      $region54: #{tpu_custom_call.1} parent=5 // pred_check_branch
        %1428 = sbr.rel (%p1426) target = $region56
      $region55: #{tpu_custom_call.1} parent=5 // pred_region
        %s1429 = ssub.s32 %s16, 2
        // Predicated region
        $region57: #{tpu_custom_call.1} parent=55 // pred_check
          %p1430 = pneg %p197
        $region58: #{tpu_custom_call.1} parent=55 // pred_check_branch
          %1432 = sbr.rel (%p1430) target = $region60
        $region59: #{tpu_custom_call.1} parent=55 // pred_region
          %s1433 = sand.u32 %s182, 1
          %s1434 = scalar_lea.sflag [#allocation3], %s1433
          %s1435 = sand.u32 %s182, 1
          %s1436 = smul.addr %s1435, 256
          %s1437 = scalar_lea.vmem [#allocation2], %s1436
          %1438 = dma.done %s1434, 4096
        $region60: #{tpu_custom_call.1} parent=55 // pred_fallthru
          _
      $region56: #{tpu_custom_call.1} parent=5 // pred_fallthru
        _
    $region6: #{tpu_custom_call.1} parent=1 // loop_footer
      %s20 = sadd.s32 1, %s16
    $region7: #{tpu_custom_call.1} parent=1 // loop_footer_branch
      %15 = sbr.rel target = $region3
    $region8: #{tpu_custom_call.1} parent=1 // loop_exit
      _
    %1439 = vsyncpa [#allocation3], 1
    %s1440 = scalar_lea.sflag [#allocation3], 1
    %1441 = vsyncpa %s1440, 1

</llo_original>
